<compile_context>
chip_gen: v7x
topology: tpu7x:2x2x1
jax: 0.10.0
libtpu: 0.0.40
codegen_flags: <defaults>
</compile_context>

<pallas_src>
import jax
import jax.numpy as jnp
from jax.experimental import pallas as pl
from jax.experimental.pallas import tpu as pltpu


def _round_up(x, m):
    return ((x + m - 1) // m) * m


def _device_kind():
    try:
        return jax.devices()[0].device_kind.lower()
    except Exception:
        return ""


def _vmem_capacity_bytes():
    try:
        return int(pltpu.get_tpu_info().vmem_capacity_bytes)
    except Exception:
        return 64 * 1024 * 1024  # conservative fallback (v7x per-TC VMEM)


def _epilogue_dtype(compute_dtype):
    """Bias-add / ReLU dtype: bf16 on chips with a bf16 VALU (v6e/v7x), f32 otherwise."""
    if jnp.dtype(compute_dtype) == jnp.dtype(jnp.float32):
        return jnp.float32
    if "v5" in _device_kind():  # v5e has no bf16 VALU -> keep the f32 epilogue
        return jnp.float32
    return compute_dtype


def _mlp_kernel(s_ref, w1_ref, b1_ref, w2_ref, b2_ref, w3_ref, b3_ref, out_ref):
    cdt = w1_ref.dtype   # MXU operand dtype (bf16 or f32)
    edt = b1_ref.dtype   # epilogue (bias-add / ReLU) dtype
    # Layer 1: Linear(s_dim -> H1) + ReLU   (f32 MXU accumulation)
    h1 = jnp.dot(s_ref[...], w1_ref[...], preferred_element_type=jnp.float32)
    h1 = jnp.maximum(h1.astype(edt) + b1_ref[...], 0).astype(cdt)
    # Layer 2: Linear(H1 -> H2) + ReLU
    h2 = jnp.dot(h1, w2_ref[...], preferred_element_type=jnp.float32)
    h2 = jnp.maximum(h2.astype(edt) + b2_ref[...], 0).astype(cdt)
    # Layer 3: Linear(H2 -> z_pad), no activation (output layer)
    z = jnp.dot(h2, w3_ref[...], preferred_element_type=jnp.float32)
    out_ref[...] = (z.astype(b3_ref.dtype) + b3_ref[...]).astype(out_ref.dtype)


def prepare_params(params, *, compute_dtype=jnp.bfloat16, lane_pad=128):
    """One-time parameter prep: cast weights to compute_dtype, biases to the epilogue dtype,
    and zero-pad the output (z) columns of W3/b3 to a multiple of `lane_pad`.

    Returns (prepared_params, z_dim). Pass z_dim back into structural_equation_forward.
    """
    w1, b1, w2, b2, w3, b3 = params
    z_dim = w3.shape[1]
    edt = _epilogue_dtype(compute_dtype)
    z_pad = max(_round_up(z_dim, lane_pad), lane_pad)
    if z_pad != z_dim:
        w3 = jnp.pad(w3, ((0, 0), (0, z_pad - z_dim)))
        b3 = jnp.pad(b3, ((0, 0), (0, z_pad - z_dim)))
    prepped = (w1.astype(compute_dtype), b1.astype(edt),
               w2.astype(compute_dtype), b2.astype(edt),
               w3.astype(compute_dtype), b3.astype(edt))
    return prepped, z_dim


def structural_equation_forward(s, params, *, z_dim=None, batch_tile=1024,
                                compute_dtype=jnp.bfloat16, lane_pad=128):
    """Fused MLP forward: ReLU(ReLU(s@W1+b1)@W2+b2)@W3+b3.

    Handles arbitrary batch sizes (pads to a tile multiple), pads the output feature
    dim to a multiple of 128 for lane-dense stores, and runs the MXU in `compute_dtype`
    (bf16 by default) with f32 accumulation. With the bf16 path the result dtype is bf16
    (intentional precision/bandwidth tradeoff); pass compute_dtype=jnp.float32 for exact
    semantics of the original torch module.
    """
    w1, b1, w2, b2, w3, b3 = params
    B, s_dim = s.shape
    h1d = w1.shape[1]
    h2d = w2.shape[1]
    if z_dim is None:
        z_dim = w3.shape[1]

    edt = _epilogue_dtype(compute_dtype)
    out_dtype = compute_dtype

    # --- lane-dense output: zero-pad W3/b3 columns up to a multiple of 128 (no-op if
    #     params came from prepare_params) ---
    z_pad = max(_round_up(z_dim, lane_pad), lane_pad)
    if w3.shape[1] != z_pad:
        w3 = jnp.pad(w3, ((0, 0), (0, z_pad - w3.shape[1])))
        b3 = jnp.pad(b3, ((0, 0), (0, z_pad - b3.shape[1])))

    # --- dtypes: matmul operands in compute_dtype, biases/epilogue in edt (no-op casts
    #     when params were pre-cast via prepare_params) ---
    s_c = s.astype(compute_dtype)
    w1c = w1 if w1.dtype == compute_dtype else w1.astype(compute_dtype)
    w2c = w2 if w2.dtype == compute_dtype else w2.astype(compute_dtype)
    w3c = w3 if w3.dtype == compute_dtype else w3.astype(compute_dtype)
    b1e = b1 if b1.dtype == edt else b1.astype(edt)
    b2e = b2 if b2.dtype == edt else b2.astype(edt)
    b3e = b3 if b3.dtype == edt else b3.astype(edt)

    c_sz = jnp.dtype(compute_dtype).itemsize
    e_sz = jnp.dtype(edt).itemsize
    o_sz = jnp.dtype(out_dtype).itemsize

    # --- pick the batch tile: multiple of 16 (bf16 sublane packing), shrink if the
    #     per-tile VMEM footprint exceeds half of the chip's VMEM ---
    def _tile_vmem(t):
        weights = 2 * ((s_dim * h1d + h1d * h2d + h2d * z_pad) * c_sz
                       + (h1d + h2d + z_pad) * e_sz)     # double-buffered constant blocks
        io = 2 * t * s_dim * c_sz + 2 * t * z_pad * o_sz  # double-buffered s / out tiles
        inter = t * (h1d + h2d) * (4 + c_sz)              # f32 accumulators + compute copies
        return weights + io + inter

    vmem_cap = _vmem_capacity_bytes()
    budget = vmem_cap // 2

    tile = max(16, min(int(batch_tile), _round_up(B, 16)))
    tile = _round_up(tile, 16)
    while tile > 16 and _tile_vmem(tile) > budget:
        new_tile = max(16, _round_up(tile // 2, 16))
        if new_tile == tile:
            break
        tile = new_tile

    # Single-step grids only get split on 2-TensorCore parts (v7x); on v5e/v6e the extra
    # grid step is pure overhead with zero parallelism gain.
    if "v7" in _device_kind() and _round_up(B, tile) // tile == 1 and tile >= 32:
        tile = _round_up(tile // 2, 16)

    Bp = _round_up(B, tile)
    grid = (Bp // tile,)
    if Bp != B:
        s_c = jnp.pad(s_c, ((0, Bp - B), (0, 0)))

    # --- cost estimate for XLA's scheduler ---
    flops = 2 * Bp * (s_dim * h1d + h1d * h2d + h2d * z_pad)
    bytes_accessed = (
        Bp * s_dim * c_sz
        + (s_dim * h1d + h1d * h2d + h2d * z_pad) * c_sz
        + (h1d + h2d + z_pad) * e_sz
        + Bp * z_pad * o_sz
    )
    cost = pl.CostEstimate(flops=flops, transcendentals=0,
                           bytes_accessed=bytes_accessed)

    vmem_limit = int(min(max(vmem_cap - (2 << 20), 16 << 20),
                         max(4 * _tile_vmem(tile), 32 << 20)))

    # Weights / biases are small (<1 MiB) -> keep fully resident in VMEM every step.
    full = lambda shape: pl.BlockSpec(shape, lambda i: (0, 0))

    out = pl.pallas_call(
        _mlp_kernel,
        out_shape=jax.ShapeDtypeStruct((Bp, z_pad), out_dtype),
        grid_spec=pltpu.PrefetchScalarGridSpec(
            num_scalar_prefetch=0,
            grid=grid,
            in_specs=[
                pl.BlockSpec((tile, s_dim), lambda i: (i, 0)),  # s tile
                full((s_dim, h1d)),   # W1
                full((1, h1d)),       # b1
                full((h1d, h2d)),     # W2
                full((1, h2d)),       # b2
                full((h2d, z_pad)),   # W3 (zero-padded cols)
                full((1, z_pad)),     # b3 (zero-padded cols)
            ],
            out_specs=pl.BlockSpec((tile, z_pad), lambda i: (i, 0)),
        ),
        compiler_params=pltpu.CompilerParams(
            dimension_semantics=("parallel",),
            vmem_limit_bytes=vmem_limit,
        ),
        cost_estimate=cost,
    )(s_c, w1c, b1e, w2c, b2e, w3c, b3e)

    return out[:B, :z_dim]


def init_params(key, s_dim, z_dim, hidden_dims=(256, 256)):
    """Deterministic init mimicking torch.nn.Linear defaults (U[-1/sqrt(fan_in), +1/sqrt(fan_in)])."""
    dims = [s_dim] + list(hidden_dims) + [z_dim]
    params = []
    for i in range(1, len(dims)):
        fan_in, fan_out = dims[i - 1], dims[i]
        key, kw, kb = jax.random.split(key, 3)
        bound = 1.0 / jnp.sqrt(fan_in)
        w = jax.random.uniform(kw, (fan_in, fan_out), jnp.float32, -bound, bound)
        b = jax.random.uniform(kb, (1, fan_out), jnp.float32, -bound, bound)
        params.extend([w, b])
    return tuple(params)


def reference_forward(s, params):
    w1, b1, w2, b2, w3, b3 = params
    h1 = jnp.maximum(s @ w1 + b1, 0.0)
    h2 = jnp.maximum(h1 @ w2 + b2, 0.0)
    return h2 @ w3 + b3


if __name__ == "__main__":
    key = jax.random.PRNGKey(0)
    key, ks = jax.random.split(key)

    batch, s_dim, z_dim = 16, 16, 32
    s = jax.random.normal(ks, (batch, s_dim), jnp.float32)
    params = init_params(key, s_dim, z_dim, hidden_dims=(256, 256))
    ref = reference_forward(s, params)

    # f32 compute path: exact semantics of the original module, tight tolerance.
    out_f32 = structural_equation_forward(s, params, compute_dtype=jnp.float32)
    out_f32 = jax.block_until_ready(out_f32)
    assert out_f32.shape == (batch, z_dim)
    assert out_f32.dtype == jnp.float32
    assert jnp.allclose(out_f32, ref, atol=1e-4, rtol=1e-4), "f32 mismatch vs reference"

    # bf16 compute path with raw f32 params (in-call cast path), loose tolerance.
    out_bf16 = structural_equation_forward(s, params)  # compute_dtype=bf16 default
    out_bf16 = jax.block_until_ready(out_bf16)
    assert out_bf16.shape == (batch, z_dim)
    assert jnp.allclose(out_bf16.astype(jnp.float32), ref, atol=5e-2, rtol=5e-2), \
        "bf16 mismatch vs reference"

    # Pre-prepared (cast + z-pad once) bf16 params: the intended steady-state calling pattern.
    prepped, zd = prepare_params(params)  # compute_dtype=bf16 default
    out_prep = structural_equation_forward(s, prepped, z_dim=zd)
    out_prep = jax.block_until_ready(out_prep)
    assert out_prep.shape == (batch, z_dim)
    assert jnp.allclose(out_prep.astype(jnp.float32), ref, atol=5e-2, rtol=5e-2), \
        "prepared-params mismatch vs reference"

    # Ragged batch (not a multiple of 16) exercises the wrapper-side padding path.
    s_ragged = s[:13]
    out_ragged = structural_equation_forward(s_ragged, params, compute_dtype=jnp.float32)
    out_ragged = jax.block_until_ready(out_ragged)
    assert out_ragged.shape == (13, z_dim)
    assert jnp.allclose(out_ragged, ref[:13], atol=1e-4, rtol=1e-4), "ragged-batch mismatch"

    print("KERNEL_OK")
</pallas_src>

<mosaic_0001>
module attributes {stable_mosaic.version = 11 : i64} {
  func.func @_mlp_kernel(%arg0: i32, %arg1: memref<16x16xf32, #tpu.memory_space<vmem>>, %arg2: memref<16x256xf32, #tpu.memory_space<vmem>>, %arg3: memref<1x256xf32, #tpu.memory_space<vmem>>, %arg4: memref<256x256xf32, #tpu.memory_space<vmem>>, %arg5: memref<1x256xf32, #tpu.memory_space<vmem>>, %arg6: memref<256x128xf32, #tpu.memory_space<vmem>>, %arg7: memref<1x128xf32, #tpu.memory_space<vmem>>, %arg8: memref<16x128xf32, #tpu.memory_space<vmem>>) attributes {dimension_semantics = [#tpu.dimension_semantics<parallel>], iteration_bounds = array<i64: 1>, scalar_prefetch = 0 : i64, scratch_operands = 0 : i64, tpu.core_type = #tpu.core_type<tc>, window_params = [{transform_indices = @transform_0, window_bounds = array<i64: 16, 16>}, {pipeline_mode = #tpu.pipeline_mode<synchronous>, transform_indices = @transform_1, window_bounds = array<i64: 16, 256>}, {pipeline_mode = #tpu.pipeline_mode<synchronous>, transform_indices = @transform_2, window_bounds = array<i64: 1, 256>}, {pipeline_mode = #tpu.pipeline_mode<synchronous>, transform_indices = @transform_3, window_bounds = array<i64: 256, 256>}, {pipeline_mode = #tpu.pipeline_mode<synchronous>, transform_indices = @transform_4, window_bounds = array<i64: 1, 256>}, {pipeline_mode = #tpu.pipeline_mode<synchronous>, transform_indices = @transform_5, window_bounds = array<i64: 256, 128>}, {pipeline_mode = #tpu.pipeline_mode<synchronous>, transform_indices = @transform_6, window_bounds = array<i64: 1, 128>}, {transform_indices = @transform_7, window_bounds = array<i64: 16, 128>}]} {
    %c0 = arith.constant 0 : index
    %c0_0 = arith.constant 0 : index
    %0 = vector.load %arg1[%c0, %c0_0] : memref<16x16xf32, #tpu.memory_space<vmem>>, vector<16x16xf32>
    %c0_1 = arith.constant 0 : index
    %c0_2 = arith.constant 0 : index
    %1 = vector.load %arg2[%c0_1, %c0_2] : memref<16x256xf32, #tpu.memory_space<vmem>>, vector<16x256xf32>
    %cst = arith.constant dense<0.000000e+00> : vector<16x256xf32>
    %2 = tpu.matmul %0, %1, %cst {dimension_numbers = #tpu.dot_dimension_numbers<[1], [0], [0], [1], [0, 0, 1, 1], [], []>} : vector<16x16xf32>, vector<16x256xf32>, vector<16x256xf32> -> vector<16x256xf32>
    %c0_3 = arith.constant 0 : index
    %c0_4 = arith.constant 0 : index
    %3 = vector.load %arg3[%c0_3, %c0_4] : memref<1x256xf32, #tpu.memory_space<vmem>>, vector<1x256xf32>
    %4 = vector.broadcast %3 : vector<1x256xf32> to vector<16x256xf32>
    %5 = arith.addf %2, %4 : vector<16x256xf32>
    %cst_5 = arith.constant 0.000000e+00 : f32
    %6 = vector.broadcast %cst_5 : f32 to vector<16x256xf32>
    %7 = arith.maximumf %5, %6 : vector<16x256xf32>
    %c0_6 = arith.constant 0 : index
    %c0_7 = arith.constant 0 : index
    %8 = vector.load %arg4[%c0_6, %c0_7] : memref<256x256xf32, #tpu.memory_space<vmem>>, vector<256x256xf32>
    %cst_8 = arith.constant dense<0.000000e+00> : vector<16x256xf32>
    %9 = tpu.matmul %7, %8, %cst_8 {dimension_numbers = #tpu.dot_dimension_numbers<[1], [0], [0], [1], [0, 0, 1, 1], [], []>} : vector<16x256xf32>, vector<256x256xf32>, vector<16x256xf32> -> vector<16x256xf32>
    %c0_9 = arith.constant 0 : index
    %c0_10 = arith.constant 0 : index
    %10 = vector.load %arg5[%c0_9, %c0_10] : memref<1x256xf32, #tpu.memory_space<vmem>>, vector<1x256xf32>
    %11 = vector.broadcast %10 : vector<1x256xf32> to vector<16x256xf32>
    %12 = arith.addf %9, %11 : vector<16x256xf32>
    %cst_11 = arith.constant 0.000000e+00 : f32
    %13 = vector.broadcast %cst_11 : f32 to vector<16x256xf32>
    %14 = arith.maximumf %12, %13 : vector<16x256xf32>
    %c0_12 = arith.constant 0 : index
    %c0_13 = arith.constant 0 : index
    %15 = vector.load %arg6[%c0_12, %c0_13] : memref<256x128xf32, #tpu.memory_space<vmem>>, vector<256x128xf32>
    %cst_14 = arith.constant dense<0.000000e+00> : vector<16x128xf32>
    %16 = tpu.matmul %14, %15, %cst_14 {dimension_numbers = #tpu.dot_dimension_numbers<[1], [0], [0], [1], [0, 0, 1, 1], [], []>} : vector<16x256xf32>, vector<256x128xf32>, vector<16x128xf32> -> vector<16x128xf32>
    %c0_15 = arith.constant 0 : index
    %c0_16 = arith.constant 0 : index
    %17 = vector.load %arg7[%c0_15, %c0_16] : memref<1x128xf32, #tpu.memory_space<vmem>>, vector<1x128xf32>
    %18 = vector.broadcast %17 : vector<1x128xf32> to vector<16x128xf32>
    %19 = arith.addf %16, %18 : vector<16x128xf32>
    %c0_17 = arith.constant 0 : index
    %c0_18 = arith.constant 0 : index
    %20 = vector.load %arg8[%c0_17, %c0_18] : memref<16x128xf32, #tpu.memory_space<vmem>>, vector<16x128xf32>
    tpu.vector_store %arg8[%c0_17, %c0_18], %19 {strides = array<i32>} : memref<16x128xf32, #tpu.memory_space<vmem>>, vector<16x128xf32>,
    return
  }
  func.func @transform_0(%arg0: i32) -> (i32, i32) {
    %c0_i32 = arith.constant 0 : i32
    %c0_i32_0 = arith.constant 0 : i32
    return %arg0, %c0_i32 : i32, i32
  }
  func.func @transform_1(%arg0: i32) -> (i32, i32) {
    %c0_i32 = arith.constant 0 : i32
    %c0_i32_0 = arith.constant 0 : i32
    %c0_i32_1 = arith.constant 0 : i32
    return %c0_i32, %c0_i32_0 : i32, i32
  }
  func.func @transform_2(%arg0: i32) -> (i32, i32) {
    %c0_i32 = arith.constant 0 : i32
    %c0_i32_0 = arith.constant 0 : i32
    %c0_i32_1 = arith.constant 0 : i32
    return %c0_i32, %c0_i32_0 : i32, i32
  }
  func.func @transform_3(%arg0: i32) -> (i32, i32) {
    %c0_i32 = arith.constant 0 : i32
    %c0_i32_0 = arith.constant 0 : i32
    %c0_i32_1 = arith.constant 0 : i32
    return %c0_i32, %c0_i32_0 : i32, i32
  }
  func.func @transform_4(%arg0: i32) -> (i32, i32) {
    %c0_i32 = arith.constant 0 : i32
    %c0_i32_0 = arith.constant 0 : i32
    %c0_i32_1 = arith.constant 0 : i32
    return %c0_i32, %c0_i32_0 : i32, i32
  }
  func.func @transform_5(%arg0: i32) -> (i32, i32) {
    %c0_i32 = arith.constant 0 : i32
    %c0_i32_0 = arith.constant 0 : i32
    %c0_i32_1 = arith.constant 0 : i32
    return %c0_i32, %c0_i32_0 : i32, i32
  }
  func.func @transform_6(%arg0: i32) -> (i32, i32) {
    %c0_i32 = arith.constant 0 : i32
    %c0_i32_0 = arith.constant 0 : i32
    %c0_i32_1 = arith.constant 0 : i32
    return %c0_i32, %c0_i32_0 : i32, i32
  }
  func.func @transform_7(%arg0: i32) -> (i32, i32) {
    %c0_i32 = arith.constant 0 : i32
    %c0_i32_0 = arith.constant 0 : i32
    return %arg0, %c0_i32 : i32, i32
  }
}

</mosaic_0001>

<llo_original>
// kernel: tpu_custom_call.1
$region0: #{tpu_custom_call.1}
  #allocation0 [shape = 'u32[]', space=smem, size = 0x4, offset = 0x4, fixed_abs, tag = 'smem constant byte address 0x4 - core index']
  #allocation1 [shape = 'u32[144,128]{1,0:T(1,128)}', space=vmem, size = 0x12000, scoped, tag = 'internal scratch']
  %s0 = inlined_call_operand.hbm [shape: f32[16,16], index: 0, kind: input, shape index: {}]
  %s1 = inlined_call_operand.hbm [shape: f32[16,256], index: 1, kind: input, shape index: {}]
  %s2 = inlined_call_operand.vmem [shape: f32[1,256], index: 2, kind: input, shape index: {}]
  %s3 = inlined_call_operand.hbm [shape: f32[256,256], index: 3, kind: input, shape index: {}]
  %s4 = inlined_call_operand.vmem [shape: f32[1,256], index: 4, kind: input, shape index: {}]
  %s5 = inlined_call_operand.hbm [shape: f32[256,128], index: 5, kind: input, shape index: {}]
  %s6 = inlined_call_operand.vmem [shape: f32[1,128], index: 6, kind: input, shape index: {}]
  %s7 = inlined_call_operand.hbm [shape: f32[16,128], index: 7, kind: output, shape index: {}]
  %s8 = sld [smem:[#allocation0]]
  $region54: #{tpu_custom_call.1} parent=0
    _
  %s10 = ssub.s32 1, %s8
  %s11 = scalar_select 0, %s10, %s8
  $region1: #{tpu_custom_call.1} parent=0
    #allocation2 [shape = 'u8[8192]{0}', space=vmem, size = 0x2000, scoped, tag = 'input window, operand 0, single buffered']
    #allocation3 [shape = 's32[1]{0}', space=sflag, size = 0x4, scoped, tag = 'scoped memory for tpu_custom_call.1']
    #allocation4 [shape = 's32[1]{0}', space=sflag, size = 0x4, scoped, tag = 'scoped memory for tpu_custom_call.1']
    #allocation5 [shape = 'u8[16384]{0}', space=vmem, size = 0x4000, scoped, tag = 'input window, operand 1, single buffered']
    #allocation6 [shape = 's32[1]{0}', space=sflag, size = 0x4, scoped, tag = 'scoped memory for tpu_custom_call.1']
    #allocation7 [shape = 'u8[262144]{0}', space=vmem, size = 0x40000, scoped, tag = 'input window, operand 3, single buffered']
    #allocation8 [shape = 'u8[131072]{0}', space=vmem, size = 0x20000, scoped, tag = 'input window, operand 5, single buffered']
    #allocation9 [shape = 's32[1]{0}', space=sflag, size = 0x4, scoped, tag = 'scoped memory for tpu_custom_call.1']
    #allocation10 [shape = 'u8[8192]{0}', space=vmem, size = 0x2000, scoped, tag = 'output window, operand 0, single buffered']
    %12 = vsyncpa [#allocation3], 0
    %13 = vsyncpa [#allocation6], 0
    %14 = vsyncpa [#allocation9], 0
    %15 = vsyncpa [#allocation4], 0
    // Predicated region
    $region2: #{tpu_custom_call.1} parent=1 // pred_check
      _
    $region3: #{tpu_custom_call.1} parent=1 // pred_check_branch
      %17 = sbr.rel (0) target = $region5
    $region4: #{tpu_custom_call.1} parent=1 // pred_region
      %s19 = ssub.s32 256, 256
      %20 = vsyncadd [#allocation3], %s19
      %s21 = sshll.u32 [#allocation2], 4
      %s22 = int_to_ptr.vmem [resolvable:$true] %s21
      %27 = dma.hbm_to_vmem [thread:$0]  %s0, 256, %s22, [#allocation3], 128, 128, 8
    $region5: #{tpu_custom_call.1} parent=1 // pred_fallthru
      _
    // Predicated region
    $region6: #{tpu_custom_call.1} parent=1 // pred_check
      _
    $region7: #{tpu_custom_call.1} parent=1 // pred_check_branch
      %29 = sbr.rel (0) target = $region9
    $region8: #{tpu_custom_call.1} parent=1 // pred_region
      %s31 = ssub.s32 512, 512
      %32 = vsyncadd [#allocation6], %s31
      %s33 = sshll.u32 [#allocation5], 4
      %s34 = int_to_ptr.vmem [resolvable:$true] %s33
      %39 = dma.hbm_to_vmem [thread:$0]  %s1, 512, %s34, [#allocation6], 256, 256, 16
    $region9: #{tpu_custom_call.1} parent=1 // pred_fallthru
      _
    // Predicated region
    $region10: #{tpu_custom_call.1} parent=1 // pred_check
      _
    $region11: #{tpu_custom_call.1} parent=1 // pred_check_branch
      %41 = sbr.rel (0) target = $region13
    $region12: #{tpu_custom_call.1} parent=1 // pred_region
      _
    $region13: #{tpu_custom_call.1} parent=1 // pred_fallthru
      _
    // Predicated region
    $region14: #{tpu_custom_call.1} parent=1 // pred_check
      _
    $region15: #{tpu_custom_call.1} parent=1 // pred_check_branch
      %43 = sbr.rel (0) target = $region17
    $region16: #{tpu_custom_call.1} parent=1 // pred_region
      %s45 = ssub.s32 8192, 8192
      %46 = vsyncadd [#allocation6], %s45
      %s47 = sshll.u32 [#allocation7], 4
      %s48 = int_to_ptr.vmem [resolvable:$true] %s47
      %53 = dma.hbm_to_vmem [thread:$0]  %s3, 8192, %s48, [#allocation6], 256, 256, 16
    $region17: #{tpu_custom_call.1} parent=1 // pred_fallthru
      _
    // Predicated region
    $region18: #{tpu_custom_call.1} parent=1 // pred_check
      _
    $region19: #{tpu_custom_call.1} parent=1 // pred_check_branch
      %55 = sbr.rel (0) target = $region21
    $region20: #{tpu_custom_call.1} parent=1 // pred_region
      _
    $region21: #{tpu_custom_call.1} parent=1 // pred_fallthru
      _
    // Predicated region
    $region22: #{tpu_custom_call.1} parent=1 // pred_check
      _
    $region23: #{tpu_custom_call.1} parent=1 // pred_check_branch
      %57 = sbr.rel (0) target = $region25
    $region24: #{tpu_custom_call.1} parent=1 // pred_region
      %s59 = ssub.s32 4096, 4096
      %60 = vsyncadd [#allocation9], %s59
      %s61 = sshll.u32 [#allocation8], 4
      %s62 = int_to_ptr.vmem [resolvable:$true] %s61
      %67 = dma.hbm_to_vmem [thread:$0]  %s5, 4096, %s62, [#allocation9], 128, 128, 8
    $region25: #{tpu_custom_call.1} parent=1 // pred_fallthru
      _
    // Predicated region
    $region26: #{tpu_custom_call.1} parent=1 // pred_check
      _
    $region27: #{tpu_custom_call.1} parent=1 // pred_check_branch
      %69 = sbr.rel (0) target = $region29
    $region28: #{tpu_custom_call.1} parent=1 // pred_region
      _
    $region29: #{tpu_custom_call.1} parent=1 // pred_fallthru
      _
    // Predicated region
    $region30: #{tpu_custom_call.1} parent=1 // pred_check
      _
    $region31: #{tpu_custom_call.1} parent=1 // pred_check_branch
      %71 = sbr.rel (0) target = $region33
    $region32: #{tpu_custom_call.1} parent=1 // pred_region
      %72 = dma.done [#allocation3], 256
    $region33: #{tpu_custom_call.1} parent=1 // pred_fallthru
      _
    // Predicated region
    $region34: #{tpu_custom_call.1} parent=1 // pred_check
      _
    $region35: #{tpu_custom_call.1} parent=1 // pred_check_branch
      %74 = sbr.rel (0) target = $region37
    $region36: #{tpu_custom_call.1} parent=1 // pred_region
      %75 = dma.done [#allocation6], 512
    $region37: #{tpu_custom_call.1} parent=1 // pred_fallthru
      _
    // Predicated region
    $region38: #{tpu_custom_call.1} parent=1 // pred_check
      _
    $region39: #{tpu_custom_call.1} parent=1 // pred_check_branch
      %77 = sbr.rel (0) target = $region41
    $region40: #{tpu_custom_call.1} parent=1 // pred_region
      %78 = dma.done [#allocation6], 8192
    $region41: #{tpu_custom_call.1} parent=1 // pred_fallthru
      _
    // Predicated region
    $region42: #{tpu_custom_call.1} parent=1 // pred_check
      _
    $region43: #{tpu_custom_call.1} parent=1 // pred_check_branch
      %80 = sbr.rel (0) target = $region45
    $region44: #{tpu_custom_call.1} parent=1 // pred_region
      %81 = dma.done [#allocation9], 4096
    $region45: #{tpu_custom_call.1} parent=1 // pred_fallthru
      _
    %v82 = vld [vmem:[#allocation2] sm:$0xff]
    %v83 = vld [vmem:[#allocation2 + $0x8] sm:$0xff]
    %v84 = vld [vmem:[#allocation5] sm:$0xff]
    %v85 = vld [vmem:[#allocation5 + $0x8] sm:$0xff]
    %v86 = vld [vmem:[#allocation5 + $0x10] sm:$0xff]
    %v87 = vld [vmem:[#allocation5 + $0x18] sm:$0xff]
    %v88 = vld [vmem:[%s2] sm:$0x3]
    %v90 = vlaneseq
    %v91 = vshrl.u32 %v90, 7
    %v92 = vsub.s32 0, %v91
    %v93 = vrot.slane %v88, %v92
    %v94 = vlaneseq
    %v95 = vshrl.u32 %v94, 7
    %v96 = vsub.s32 1, %v95
    %v97 = vrot.slane %v88, %v96
    %vm100 = vcmask 130048
    %v102 = vsel %vm100, %v82, 0
    %v105 = vsel %vm100, %v83, 0
    %107 = vmatprep.subr.mxu0 %v85
    %108 = vmatpush1.msra.mxu0 %v84
    %109 = vmatprep.subr.mxu0 %v87
    %110 = vmatpush1.msra.mxu0 %v86
    %111 = vmatprep.subr.mxu0 0.0
    %112 = vmatpush1.msra.mxu0 0.0
    %113 = vmatprep.subr.mxu0 0.0
    %114 = vmatpush1.msra.mxu0 0.0
    %115 = vmatprep.subr.mxu0 0.0
    %116 = vmatpush1.msra.mxu0 0.0
    %117 = vmatprep.subr.mxu0 0.0
    %118 = vmatpush1.msra.mxu0 0.0
    %119 = vmatprep.subr.mxu0 0.0
    %120 = vmatpush1.msra.mxu0 0.0
    %121 = vmatprep.subr.mxu0 0.0
    %122 = vmatpush1.msra.mxu0 0.0
    %123 = vmatprep.subr.mxu0 0.0
    %124 = vmatpush1.msra.mxu0 0.0
    %125 = vmatprep.subr.mxu0 0.0
    %126 = vmatpush1.msra.mxu0 0.0
    %127 = vmatprep.subr.mxu0 0.0
    %128 = vmatpush1.msra.mxu0 0.0
    %129 = vmatprep.subr.mxu0 0.0
    %130 = vmatpush1.msra.mxu0 0.0
    %131 = vmatprep.subr.mxu0 0.0
    %132 = vmatpush1.msra.mxu0 0.0
    %133 = vmatprep.subr.mxu0 0.0
    %134 = vmatpush1.msra.mxu0 0.0
    %135 = vmatprep.subr.mxu0 0.0
    %136 = vmatpush1.msra.mxu0 0.0
    %137 = vmatprep.subr.mxu0 0.0
    %138 = vmatpush1.msra.mxu0 0.0
    %139 = vmatprep.subr.mxu0 0.0
    %140 = vmatpush1.msra.mxu0 0.0
    %141 = vmatprep.subr.mxu0 0.0
    %142 = vmatpush1.msra.mxu0 0.0
    %143 = vmatprep.subr.mxu0 0.0
    %144 = vmatpush1.msra.mxu0 0.0
    %145 = vmatprep.subr.mxu0 0.0
    %146 = vmatpush1.msra.mxu0 0.0
    %147 = vmatprep.subr.mxu0 0.0
    %148 = vmatpush1.msra.mxu0 0.0
    %149 = vmatprep.subr.mxu0 0.0
    %150 = vmatpush1.msra.mxu0 0.0
    %151 = vmatprep.subr.mxu0 0.0
    %152 = vmatpush1.msra.mxu0 0.0
    %153 = vmatprep.subr.mxu0 0.0
    %154 = vmatpush1.msra.mxu0 0.0
    %155 = vmatprep.subr.mxu0 0.0
    %156 = vmatpush1.msra.mxu0 0.0
    %157 = vmatprep.subr.mxu0 0.0
    %158 = vmatpush1.msra.mxu0 0.0
    %159 = vmatprep.subr.mxu0 0.0
    %160 = vmatpush1.msra.mxu0 0.0
    %161 = vmatprep.subr.mxu0 0.0
    %162 = vmatpush1.msra.mxu0 0.0
    %163 = vmatprep.subr.mxu0 0.0
    %164 = vmatpush1.msra.mxu0 0.0
    %165 = vmatprep.subr.mxu0 0.0
    %166 = vmatpush1.msra.mxu0 0.0
    %167 = vmatprep.subr.mxu0 0.0
    %168 = vmatpush1.msra.mxu0 0.0
    %169 = vmatprep.subr.mxu0 0.0
    %170 = vmatpush1.msra.mxu0 0.0
    %171 = vmatprep.mubr.f32.mxu0 0.0
    %172 = vmatmul.mubr.f32.gmra.mrb[0].mxu0 %v102
    %v173 = vpop.f32.mrb[0].mxu0
    %v174 = vadd.f32 %v93, %v173
    %v175 = vpop.f32.mrb[0].mxu0
    %v176 = vadd.f32 %v97, %v175
    %177 = vmatprep.mubr.f32.mxu0 0.0
    %178 = vmatmul.mubr.f32.gmra.mrb[0].mxu0 %v105
    %v179 = vpop.f32.mrb[0].mxu0
    %v180 = vadd.f32 %v93, %v179
    %v181 = vpop.f32.mrb[0].mxu0
    %v182 = vadd.f32 %v97, %v181
    %183 = vdwg.mxu0
    %v184 = vmax.f32 %v174, 0.0
    %v185 = vmax.f32 %v176, 0.0
    %v186 = vmax.f32 %v180, 0.0
    %v187 = vmax.f32 %v182, 0.0
    %v188 = vld [vmem:[#allocation7] sm:$0xff]
    %v189 = vld [vmem:[#allocation7 + $0x8] sm:$0xff]
    %v190 = vld [vmem:[#allocation7 + $0x10] sm:$0xff]
    %v191 = vld [vmem:[#allocation7 + $0x18] sm:$0xff]
    %v192 = vld [vmem:[#allocation7 + $0x20] sm:$0xff]
    %v193 = vld [vmem:[#allocation7 + $0x28] sm:$0xff]
    %v194 = vld [vmem:[#allocation7 + $0x30] sm:$0xff]
    %v195 = vld [vmem:[#allocation7 + $0x38] sm:$0xff]
    %v196 = vld [vmem:[#allocation7 + $0x40] sm:$0xff]
    %v197 = vld [vmem:[#allocation7 + $0x48] sm:$0xff]
    %v198 = vld [vmem:[#allocation7 + $0x50] sm:$0xff]
    %v199 = vld [vmem:[#allocation7 + $0x58] sm:$0xff]
    %v200 = vld [vmem:[#allocation7 + $0x60] sm:$0xff]
    %v201 = vld [vmem:[#allocation7 + $0x68] sm:$0xff]
    %v202 = vld [vmem:[#allocation7 + $0x70] sm:$0xff]
    %v203 = vld [vmem:[#allocation7 + $0x78] sm:$0xff]
    %v204 = vld [vmem:[#allocation7 + $0x80] sm:$0xff]
    %v205 = vld [vmem:[#allocation7 + $0x88] sm:$0xff]
    %v206 = vld [vmem:[#allocation7 + $0x90] sm:$0xff]
    %v207 = vld [vmem:[#allocation7 + $0x98] sm:$0xff]
    %v208 = vld [vmem:[#allocation7 + $0xa0] sm:$0xff]
    %v209 = vld [vmem:[#allocation7 + $0xa8] sm:$0xff]
    %v210 = vld [vmem:[#allocation7 + $0xb0] sm:$0xff]
    %v211 = vld [vmem:[#allocation7 + $0xb8] sm:$0xff]
    %v212 = vld [vmem:[#allocation7 + $0xc0] sm:$0xff]
    %v213 = vld [vmem:[#allocation7 + $0xc8] sm:$0xff]
    %v214 = vld [vmem:[#allocation7 + $0xd0] sm:$0xff]
    %v215 = vld [vmem:[#allocation7 + $0xd8] sm:$0xff]
    %v216 = vld [vmem:[#allocation7 + $0xe0] sm:$0xff]
    %v217 = vld [vmem:[#allocation7 + $0xe8] sm:$0xff]
    %v218 = vld [vmem:[#allocation7 + $0xf0] sm:$0xff]
    %v219 = vld [vmem:[#allocation7 + $0xf8] sm:$0xff]
    %v220 = vld [vmem:[#allocation7 + $0x100] sm:$0xff]
    %v221 = vld [vmem:[#allocation7 + $0x108] sm:$0xff]
    %v222 = vld [vmem:[#allocation7 + $0x110] sm:$0xff]
    %v223 = vld [vmem:[#allocation7 + $0x118] sm:$0xff]
    %v224 = vld [vmem:[#allocation7 + $0x120] sm:$0xff]
    %v225 = vld [vmem:[#allocation7 + $0x128] sm:$0xff]
    %v226 = vld [vmem:[#allocation7 + $0x130] sm:$0xff]
    %v227 = vld [vmem:[#allocation7 + $0x138] sm:$0xff]
    %v228 = vld [vmem:[#allocation7 + $0x140] sm:$0xff]
    %v229 = vld [vmem:[#allocation7 + $0x148] sm:$0xff]
    %v230 = vld [vmem:[#allocation7 + $0x150] sm:$0xff]
    %v231 = vld [vmem:[#allocation7 + $0x158] sm:$0xff]
    %v232 = vld [vmem:[#allocation7 + $0x160] sm:$0xff]
    %v233 = vld [vmem:[#allocation7 + $0x168] sm:$0xff]
    %v234 = vld [vmem:[#allocation7 + $0x170] sm:$0xff]
    %v235 = vld [vmem:[#allocation7 + $0x178] sm:$0xff]
    %v236 = vld [vmem:[#allocation7 + $0x180] sm:$0xff]
    %v237 = vld [vmem:[#allocation7 + $0x188] sm:$0xff]
    %v238 = vld [vmem:[#allocation7 + $0x190] sm:$0xff]
    %v239 = vld [vmem:[#allocation7 + $0x198] sm:$0xff]
    %v240 = vld [vmem:[#allocation7 + $0x1a0] sm:$0xff]
    %v241 = vld [vmem:[#allocation7 + $0x1a8] sm:$0xff]
    %v242 = vld [vmem:[#allocation7 + $0x1b0] sm:$0xff]
    %v243 = vld [vmem:[#allocation7 + $0x1b8] sm:$0xff]
    %v244 = vld [vmem:[#allocation7 + $0x1c0] sm:$0xff]
    %v245 = vld [vmem:[#allocation7 + $0x1c8] sm:$0xff]
    %v246 = vld [vmem:[#allocation7 + $0x1d0] sm:$0xff]
    %v247 = vld [vmem:[#allocation7 + $0x1d8] sm:$0xff]
    %v248 = vld [vmem:[#allocation7 + $0x1e0] sm:$0xff]
    %v249 = vld [vmem:[#allocation7 + $0x1e8] sm:$0xff]
    %v250 = vld [vmem:[#allocation7 + $0x1f0] sm:$0xff]
    %v251 = vld [vmem:[#allocation7 + $0x1f8] sm:$0xff]
    %v252 = vld [vmem:[%s4] sm:$0x3]
    %v254 = vlaneseq
    %v255 = vshrl.u32 %v254, 7
    %v256 = vsub.s32 0, %v255
    %v257 = vrot.slane %v252, %v256
    %v258 = vlaneseq
    %v259 = vshrl.u32 %v258, 7
    %v260 = vsub.s32 1, %v259
    %v261 = vrot.slane %v252, %v260
    %264 = vmatprep.subr.mxu0 %v189
    %265 = vmatpush1.msra.mxu0 %v188
    %266 = vmatprep.subr.mxu0 %v191
    %267 = vmatpush1.msra.mxu0 %v190
    %268 = vmatprep.subr.mxu0 %v193
    %269 = vmatpush1.msra.mxu0 %v192
    %270 = vmatprep.subr.mxu0 %v195
    %271 = vmatpush1.msra.mxu0 %v194
    %272 = vmatprep.subr.mxu0 %v197
    %273 = vmatpush1.msra.mxu0 %v196
    %274 = vmatprep.subr.mxu0 %v199
    %275 = vmatpush1.msra.mxu0 %v198
    %276 = vmatprep.subr.mxu0 %v201
    %277 = vmatpush1.msra.mxu0 %v200
    %278 = vmatprep.subr.mxu0 %v203
    %279 = vmatpush1.msra.mxu0 %v202
    %280 = vmatprep.subr.mxu0 %v205
    %281 = vmatpush1.msra.mxu0 %v204
    %282 = vmatprep.subr.mxu0 %v207
    %283 = vmatpush1.msra.mxu0 %v206
    %284 = vmatprep.subr.mxu0 %v209
    %285 = vmatpush1.msra.mxu0 %v208
    %286 = vmatprep.subr.mxu0 %v211
    %287 = vmatpush1.msra.mxu0 %v210
    %288 = vmatprep.subr.mxu0 %v213
    %289 = vmatpush1.msra.mxu0 %v212
    %290 = vmatprep.subr.mxu0 %v215
    %291 = vmatpush1.msra.mxu0 %v214
    %292 = vmatprep.subr.mxu0 %v217
    %293 = vmatpush1.msra.mxu0 %v216
    %294 = vmatprep.subr.mxu0 %v219
    %295 = vmatpush1.msra.mxu0 %v218
    %296 = vmatprep.subr.mxu0 %v221
    %297 = vmatpush1.msra.mxu0 %v220
    %298 = vmatprep.subr.mxu0 %v223
    %299 = vmatpush1.msra.mxu0 %v222
    %300 = vmatprep.subr.mxu0 %v225
    %301 = vmatpush1.msra.mxu0 %v224
    %302 = vmatprep.subr.mxu0 %v227
    %303 = vmatpush1.msra.mxu0 %v226
    %304 = vmatprep.subr.mxu0 %v229
    %305 = vmatpush1.msra.mxu0 %v228
    %306 = vmatprep.subr.mxu0 %v231
    %307 = vmatpush1.msra.mxu0 %v230
    %308 = vmatprep.subr.mxu0 %v233
    %309 = vmatpush1.msra.mxu0 %v232
    %310 = vmatprep.subr.mxu0 %v235
    %311 = vmatpush1.msra.mxu0 %v234
    %312 = vmatprep.subr.mxu0 %v237
    %313 = vmatpush1.msra.mxu0 %v236
    %314 = vmatprep.subr.mxu0 %v239
    %315 = vmatpush1.msra.mxu0 %v238
    %316 = vmatprep.subr.mxu0 %v241
    %317 = vmatpush1.msra.mxu0 %v240
    %318 = vmatprep.subr.mxu0 %v243
    %319 = vmatpush1.msra.mxu0 %v242
    %320 = vmatprep.subr.mxu0 %v245
    %321 = vmatpush1.msra.mxu0 %v244
    %322 = vmatprep.subr.mxu0 %v247
    %323 = vmatpush1.msra.mxu0 %v246
    %324 = vmatprep.subr.mxu0 %v249
    %325 = vmatpush1.msra.mxu0 %v248
    %326 = vmatprep.subr.mxu0 %v251
    %327 = vmatpush1.msra.mxu0 %v250
    %328 = vmatprep.mubr.f32.mxu0 %v185
    %329 = vmatmul.mubr.f32.gmra.mrb[0].mxu0 %v184
    %v330 = vpop.f32.mrb[0].mxu0
    %v331 = vadd.f32 %v257, %v330
    %v332 = vpop.f32.mrb[0].mxu0
    %v333 = vadd.f32 %v261, %v332
    %334 = vmatprep.mubr.f32.mxu0 %v187
    %335 = vmatmul.mubr.f32.gmra.mrb[0].mxu0 %v186
    %v336 = vpop.f32.mrb[0].mxu0
    %v337 = vadd.f32 %v257, %v336
    %v338 = vpop.f32.mrb[0].mxu0
    %v339 = vadd.f32 %v261, %v338
    %340 = vdwg.mxu0
    %v341 = vmax.f32 %v331, 0.0
    %v342 = vmax.f32 %v333, 0.0
    %v343 = vmax.f32 %v337, 0.0
    %v344 = vmax.f32 %v339, 0.0
    %v345 = vld [vmem:[#allocation8] sm:$0xff]
    %v346 = vld [vmem:[#allocation8 + $0x8] sm:$0xff]
    %v347 = vld [vmem:[#allocation8 + $0x10] sm:$0xff]
    %v348 = vld [vmem:[#allocation8 + $0x18] sm:$0xff]
    %v349 = vld [vmem:[#allocation8 + $0x20] sm:$0xff]
    %v350 = vld [vmem:[#allocation8 + $0x28] sm:$0xff]
    %v351 = vld [vmem:[#allocation8 + $0x30] sm:$0xff]
    %v352 = vld [vmem:[#allocation8 + $0x38] sm:$0xff]
    %v353 = vld [vmem:[#allocation8 + $0x40] sm:$0xff]
    %v354 = vld [vmem:[#allocation8 + $0x48] sm:$0xff]
    %v355 = vld [vmem:[#allocation8 + $0x50] sm:$0xff]
    %v356 = vld [vmem:[#allocation8 + $0x58] sm:$0xff]
    %v357 = vld [vmem:[#allocation8 + $0x60] sm:$0xff]
    %v358 = vld [vmem:[#allocation8 + $0x68] sm:$0xff]
    %v359 = vld [vmem:[#allocation8 + $0x70] sm:$0xff]
    %v360 = vld [vmem:[#allocation8 + $0x78] sm:$0xff]
    %v361 = vld [vmem:[#allocation8 + $0x80] sm:$0xff]
    %v362 = vld [vmem:[#allocation8 + $0x88] sm:$0xff]
    %v363 = vld [vmem:[#allocation8 + $0x90] sm:$0xff]
    %v364 = vld [vmem:[#allocation8 + $0x98] sm:$0xff]
    %v365 = vld [vmem:[#allocation8 + $0xa0] sm:$0xff]
    %v366 = vld [vmem:[#allocation8 + $0xa8] sm:$0xff]
    %v367 = vld [vmem:[#allocation8 + $0xb0] sm:$0xff]
    %v368 = vld [vmem:[#allocation8 + $0xb8] sm:$0xff]
    %v369 = vld [vmem:[#allocation8 + $0xc0] sm:$0xff]
    %v370 = vld [vmem:[#allocation8 + $0xc8] sm:$0xff]
    %v371 = vld [vmem:[#allocation8 + $0xd0] sm:$0xff]
    %v372 = vld [vmem:[#allocation8 + $0xd8] sm:$0xff]
    %v373 = vld [vmem:[#allocation8 + $0xe0] sm:$0xff]
    %v374 = vld [vmem:[#allocation8 + $0xe8] sm:$0xff]
    %v375 = vld [vmem:[#allocation8 + $0xf0] sm:$0xff]
    %v376 = vld [vmem:[#allocation8 + $0xf8] sm:$0xff]
    %v377 = vld [vmem:[%s6] sm:$0x1]
    %v379 = vlaneseq
    %v380 = vshrl.u32 %v379, 7
    %v381 = vsub.s32 0, %v380
    %v382 = vrot.slane %v377, %v381
    %384 = vmatprep.subr.mxu0 0.0
    %385 = vmatpush1.msra.mxu0 %v345
    %386 = vmatprep.subr.mxu0 0.0
    %387 = vmatpush1.msra.mxu0 %v346
    %388 = vmatprep.subr.mxu0 0.0
    %389 = vmatpush1.msra.mxu0 %v347
    %390 = vmatprep.subr.mxu0 0.0
    %391 = vmatpush1.msra.mxu0 %v348
    %392 = vmatprep.subr.mxu0 0.0
    %393 = vmatpush1.msra.mxu0 %v349
    %394 = vmatprep.subr.mxu0 0.0
    %395 = vmatpush1.msra.mxu0 %v350
    %396 = vmatprep.subr.mxu0 0.0
    %397 = vmatpush1.msra.mxu0 %v351
    %398 = vmatprep.subr.mxu0 0.0
    %399 = vmatpush1.msra.mxu0 %v352
    %400 = vmatprep.subr.mxu0 0.0
    %401 = vmatpush1.msra.mxu0 %v353
    %402 = vmatprep.subr.mxu0 0.0
    %403 = vmatpush1.msra.mxu0 %v354
    %404 = vmatprep.subr.mxu0 0.0
    %405 = vmatpush1.msra.mxu0 %v355
    %406 = vmatprep.subr.mxu0 0.0
    %407 = vmatpush1.msra.mxu0 %v356
    %408 = vmatprep.subr.mxu0 0.0
    %409 = vmatpush1.msra.mxu0 %v357
    %410 = vmatprep.subr.mxu0 0.0
    %411 = vmatpush1.msra.mxu0 %v358
    %412 = vmatprep.subr.mxu0 0.0
    %413 = vmatpush1.msra.mxu0 %v359
    %414 = vmatprep.subr.mxu0 0.0
    %415 = vmatpush1.msra.mxu0 %v360
    %416 = vmatprep.subr.mxu0 0.0
    %417 = vmatpush1.msra.mxu0 %v361
    %418 = vmatprep.subr.mxu0 0.0
    %419 = vmatpush1.msra.mxu0 %v362
    %420 = vmatprep.subr.mxu0 0.0
    %421 = vmatpush1.msra.mxu0 %v363
    %422 = vmatprep.subr.mxu0 0.0
    %423 = vmatpush1.msra.mxu0 %v364
    %424 = vmatprep.subr.mxu0 0.0
    %425 = vmatpush1.msra.mxu0 %v365
    %426 = vmatprep.subr.mxu0 0.0
    %427 = vmatpush1.msra.mxu0 %v366
    %428 = vmatprep.subr.mxu0 0.0
    %429 = vmatpush1.msra.mxu0 %v367
    %430 = vmatprep.subr.mxu0 0.0
    %431 = vmatpush1.msra.mxu0 %v368
    %432 = vmatprep.subr.mxu0 0.0
    %433 = vmatpush1.msra.mxu0 %v369
    %434 = vmatprep.subr.mxu0 0.0
    %435 = vmatpush1.msra.mxu0 %v370
    %436 = vmatprep.subr.mxu0 0.0
    %437 = vmatpush1.msra.mxu0 %v371
    %438 = vmatprep.subr.mxu0 0.0
    %439 = vmatpush1.msra.mxu0 %v372
    %440 = vmatprep.subr.mxu0 0.0
    %441 = vmatpush1.msra.mxu0 %v373
    %442 = vmatprep.subr.mxu0 0.0
    %443 = vmatpush1.msra.mxu0 %v374
    %444 = vmatprep.subr.mxu0 0.0
    %445 = vmatpush1.msra.mxu0 %v375
    %446 = vmatprep.subr.mxu0 0.0
    %447 = vmatpush1.msra.mxu0 %v376
    %448 = vmatprep.mubr.f32.mxu0 %v342
    %449 = vmatmul.mubr.f32.gmra.mrb[0].mxu0 %v341
    %v450 = vpop.f32.mrb[0].mxu0
    %v451 = vadd.f32 %v382, %v450
    %v452 = vpop.f32.mrb[0].mxu0
    %453 = vmatprep.mubr.f32.mxu0 %v344
    %454 = vmatmul.mubr.f32.gmra.mrb[0].mxu0 %v343
    %v455 = vpop.f32.mrb[0].mxu0
    %v456 = vadd.f32 %v382, %v455
    %v457 = vpop.f32.mrb[0].mxu0
    %458 = vdwg.mxu0
    %459 = vst [vmem:[#allocation10] sm:$0xff] %v451
    %460 = vst [vmem:[#allocation10 + $0x8] sm:$0xff] %v456
    // Predicated region
    $region46: #{tpu_custom_call.1} parent=1 // pred_check
      _
    $region47: #{tpu_custom_call.1} parent=1 // pred_check_branch
      %462 = sbr.rel (0) target = $region49
    $region48: #{tpu_custom_call.1} parent=1 // pred_region
      %s464 = ssub.s32 256, 256
      %465 = vsyncadd [#allocation4], %s464
      %s466 = sshll.u32 [#allocation10], 4
      %s467 = int_to_ptr.vmem [resolvable:$true] %s466
      %472 = dma.vmem_to_hbm [thread:$0]  %s467, 256, %s7, [#allocation4], 128, 128, 8
    $region49: #{tpu_custom_call.1} parent=1 // pred_fallthru
      _
    // Predicated region
    $region50: #{tpu_custom_call.1} parent=1 // pred_check
      _
    $region51: #{tpu_custom_call.1} parent=1 // pred_check_branch
      %474 = sbr.rel (0) target = $region53
    $region52: #{tpu_custom_call.1} parent=1 // pred_region
      %475 = dma.done [#allocation4], 256
    $region53: #{tpu_custom_call.1} parent=1 // pred_fallthru
      _
    %476 = vsyncpa [#allocation3], 1
    %477 = vsyncpa [#allocation6], 1
    %478 = vsyncpa [#allocation9], 1
    %479 = vsyncpa [#allocation4], 1

</llo_original>
